<compile_context>
chip_gen: v7x
topology: tpu7x:2x2x1
jax: 0.10.0
libtpu: 0.0.40
codegen_flags: <defaults>
</compile_context>

<pallas_src>
import functools

import jax
import jax.numpy as jnp
from jax.experimental import pallas as pl
from jax.experimental.pallas import tpu as pltpu


# ---------------------------------------------------------------------------
# Pallas kernel: AttentionDecoder hot path (single-head glimpse + pointer),
# processing a tile of BT batch instances per grid step.
# ---------------------------------------------------------------------------
def attention_decoder_kernel(q_ref, emb_ref, mask_ref, wkvl_ref, wo_ref,
                             probs_ref, k_scr, v_scr, lk_scr):
    BT, N, D = emb_ref.shape
    inv_sqrt_d = 1.0 / (float(D) ** 0.5)

    wkvl = wkvl_ref[...]                      # (D, 3D) bf16, fused [Wk | Wv | Wlk]

    # Fused K/V/logit-K projection: one bf16 MXU matmul per tile row (f32 accumulate).
    # Results go to VMEM scratch so the batched attention below sees (BT, N, D) arrays.
    for b in range(BT):                       # static unroll (BT is a Python int)
        kvl_b = jnp.dot(emb_ref[b], wkvl,
                        preferred_element_type=jnp.float32)       # (N, 3D) f32
        k_scr[b] = kvl_b[:, 0:D]
        v_scr[b] = kvl_b[:, D:2 * D]
        lk_scr[b] = kvl_b[:, 2 * D:3 * D]

    k = k_scr[...]                            # (BT, N, D) f32
    v = v_scr[...]                            # (BT, N, D) f32
    lk = lk_scr[...]                          # (BT, N, D) f32

    q = q_ref[...]                            # (BT, D) f32 (query projection hoisted to XLA)
    neg = mask_ref[...] * (-1e9)              # (BT, N); add-form masking (no compare+select)

    # glimpse attention: masked softmax over the N actions, batched over the tile (VPU/XLU)
    scores = jnp.sum(q[:, None, :] * k, axis=-1) * inv_sqrt_d + neg          # (BT, N)
    scores = scores - jnp.max(scores, axis=-1, keepdims=True)
    e = jnp.exp(scores)
    attn = e * pl.reciprocal(jnp.sum(e, axis=-1, keepdims=True), approx=True)

    glimpse = jnp.sum(attn[:, :, None] * v, axis=1)                          # (BT, D)
    glimpse = jnp.dot(glimpse.astype(wo_ref.dtype), wo_ref[...],
                      preferred_element_type=jnp.float32)                    # (BT, D)

    # pointer logits with tanh clipping (C = 10, Kool-style) -> masked softmax -> probs
    logits = jnp.sum(glimpse[:, None, :] * lk, axis=-1) * inv_sqrt_d         # (BT, N)
    logits = 10.0 * jnp.tanh(logits) + neg
    logits = logits - jnp.max(logits, axis=-1, keepdims=True)
    el = jnp.exp(logits)
    probs_ref[...] = el * pl.reciprocal(jnp.sum(el, axis=-1, keepdims=True), approx=True)


# ---------------------------------------------------------------------------
# Wrapper: HetFlatDecoder.forward semantics.
# ---------------------------------------------------------------------------
@functools.partial(jax.jit, static_argnames=("num_skus", "block_batch"))
def het_flat_decoder_forward(comb_embs, demand, supply, shelf_mask,
                             current_node, dyn_feat, params, *, num_skus,
                             block_batch=8):
    B, N, D = comb_embs.shape
    wq, wk, wv, wo, wlk = params

    # ---- _mask_fn (glue, elementwise bool algebra over the state) ----
    mask_all_comb = (demand[:, None, :] * supply) < 1e-5            # [B, n_shelves, num_skus]
    depot_mask = shelf_mask[:, :1]                                  # [B, 1]
    comb_mask = shelf_mask[:, 1:, None] | mask_all_comb             # [B, n_shelves, num_skus]
    mask = jnp.concatenate([depot_mask, comb_mask.reshape(B, -1)], axis=1)   # [B, N]
    mask_f = mask.astype(jnp.float32)

    # ---- decoder context + hoisted query projection (one batched XLA matmul) ----
    # TODO(synk): decoder_dynamic_features node-update path (dynamic K/V refresh) not modelled.
    graph_emb = comb_embs.mean(axis=1)                                         # [B, D]
    cur_emb = jnp.take_along_axis(comb_embs, current_node[:, None, None], axis=1)[:, 0]
    ctx = jnp.concatenate([graph_emb, cur_emb, dyn_feat], axis=-1)             # [B, Dc]
    q = jnp.dot(ctx, wq)                                                       # [B, D] f32

    # ---- fused bf16 MXU operands (f32 accumulation happens inside the kernel) ----
    w_kvl = jnp.concatenate([wk, wv, wlk], axis=1).astype(jnp.bfloat16)        # [D, 3D]
    wo_b = wo.astype(jnp.bfloat16)
    emb_b = comb_embs.astype(jnp.bfloat16)

    # Batch-tiled grid: BT instances per grid step; constant-index weight blocks are
    # fetched once and stay resident across the grid.
    BT = min(block_batch, B)
    grid_b = pl.cdiv(B, BT)

    probs = pl.pallas_call(
        attention_decoder_kernel,
        out_shape=jax.ShapeDtypeStruct((B, N), jnp.float32),
        grid_spec=pltpu.PrefetchScalarGridSpec(
            num_scalar_prefetch=0,
            grid=(grid_b,),
            in_specs=[
                pl.BlockSpec((BT, D), lambda i: (i, 0)),         # q (hoisted projection)
                pl.BlockSpec((BT, N, D), lambda i: (i, 0, 0)),   # comb_embs (bf16)
                pl.BlockSpec((BT, N), lambda i: (i, 0)),         # mask
                pl.BlockSpec((D, 3 * D), lambda i: (0, 0)),      # fused [Wk|Wv|Wlk]
                pl.BlockSpec((D, D), lambda i: (0, 0)),          # Wo
            ],
            out_specs=pl.BlockSpec((BT, N), lambda i: (i, 0)),
            scratch_shapes=[pltpu.VMEM((BT, N, D), jnp.float32)] * 3,
        ),
        compiler_params=pltpu.CompilerParams(
            dimension_semantics=("parallel",)),
    )(q, emb_b, mask_f, w_kvl, wo_b)

    # ---- generator.step (greedy decode; sampling generator is stochastic bookkeeping) ----
    selected_node = jnp.argmax(probs, axis=-1).astype(jnp.int32)            # [B]
    probs_selected = jnp.take_along_axis(probs, selected_node[:, None], axis=1)[:, 0]

    # ---- flattened action -> (shelf, sku), exactly as in the torch.no_grad() block ----
    node_minus_one = selected_node - 1
    shelf = jnp.floor_divide(node_minus_one, num_skus) + 1                  # floor toward -inf
    sku = jnp.mod(node_minus_one, num_skus) + 1
    sku = jnp.where(node_minus_one < 0, 0, sku)

    # state.update(shelf=shelf, sku=sku - 1)
    return probs, selected_node, probs_selected, shelf, sku - 1


# ---------------------------------------------------------------------------
# Deterministic parameter init (shapes implied by the module's __init__).
# ---------------------------------------------------------------------------
def init_params(key, d_context, d_hidden):
    ks = jax.random.split(key, 5)
    scale_c = 1.0 / (d_context ** 0.5)
    scale_h = 1.0 / (d_hidden ** 0.5)
    wq = jax.random.normal(ks[0], (d_context, d_hidden), jnp.float32) * scale_c
    wk = jax.random.normal(ks[1], (d_hidden, d_hidden), jnp.float32) * scale_h
    wv = jax.random.normal(ks[2], (d_hidden, d_hidden), jnp.float32) * scale_h
    wo = jax.random.normal(ks[3], (d_hidden, d_hidden), jnp.float32) * scale_h
    wlk = jax.random.normal(ks[4], (d_hidden, d_hidden), jnp.float32) * scale_h
    return (wq, wk, wv, wo, wlk)


if __name__ == "__main__":
    B = 2            # batch
    n_shelves = 4
    num_skus = 4
    D = 32           # hidden dim
    N = 1 + n_shelves * num_skus        # depot + flattened (shelf, sku) actions = 17
    Dc = 2 * D + 1                      # graph emb + current node emb + 1 dynamic feature

    key = jax.random.PRNGKey(0)
    k_emb, k_dem, k_sup, k_msk, k_dyn, k_par = jax.random.split(key, 6)

    comb_embs = jax.random.normal(k_emb, (B, N, D), jnp.float32)
    demand = jax.random.uniform(k_dem, (B, num_skus), jnp.float32, 0.1, 1.0)
    supply = jax.random.uniform(k_sup, (B, n_shelves, num_skus), jnp.float32, 0.0, 1.0)
    shelf_mask = jax.random.uniform(k_msk, (B, n_shelves + 1)) < 0.3
    shelf_mask = shelf_mask.at[:, 0].set(False)        # depot always feasible
    current_node = jnp.zeros((B,), jnp.int32)          # start at depot
    dyn_feat = jax.random.uniform(k_dyn, (B, 1), jnp.float32)   # e.g. remaining load

    params = init_params(k_par, Dc, D)

    probs, selected, probs_sel, shelf, sku = het_flat_decoder_forward(
        comb_embs, demand, supply, shelf_mask, current_node, dyn_feat, params,
        num_skus=num_skus, block_batch=8)

    jax.block_until_ready((probs, selected, probs_sel, shelf, sku))
    print("KERNEL_OK")
</pallas_src>

<mosaic_0001>
module attributes {stable_mosaic.version = 11 : i64} {
  func.func @attention_decoder_kernel(%arg0: i32, %arg1: memref<2x32xf32, #tpu.memory_space<vmem>>, %arg2: memref<2x17x32xbf16, #tpu.memory_space<vmem>>, %arg3: memref<2x17xf32, #tpu.memory_space<vmem>>, %arg4: memref<32x96xbf16, #tpu.memory_space<vmem>>, %arg5: memref<32x32xbf16, #tpu.memory_space<vmem>>, %arg6: memref<2x17xf32, #tpu.memory_space<vmem>>, %arg7: memref<2x17x32xf32, #tpu.memory_space<vmem>>, %arg8: memref<2x17x32xf32, #tpu.memory_space<vmem>>, %arg9: memref<2x17x32xf32, #tpu.memory_space<vmem>>) attributes {dimension_semantics = [#tpu.dimension_semantics<parallel>], iteration_bounds = array<i64: 1>, scalar_prefetch = 0 : i64, scratch_operands = 3 : i64, tpu.core_type = #tpu.core_type<tc>, window_params = [{transform_indices = @transform_0, window_bounds = array<i64: 2, 32>}, {transform_indices = @transform_1, window_bounds = array<i64: 2, 17, 32>}, {transform_indices = @transform_2, window_bounds = array<i64: 2, 17>}, {pipeline_mode = #tpu.pipeline_mode<synchronous>, transform_indices = @transform_3, window_bounds = array<i64: 32, 96>}, {pipeline_mode = #tpu.pipeline_mode<synchronous>, transform_indices = @transform_4, window_bounds = array<i64: 32, 32>}, {transform_indices = @transform_5, window_bounds = array<i64: 2, 17>}]} {
    %c0 = arith.constant 0 : index
    %c0_0 = arith.constant 0 : index
    %0 = vector.load %arg4[%c0, %c0_0] : memref<32x96xbf16, #tpu.memory_space<vmem>>, vector<32x96xbf16>
    %c0_1 = arith.constant 0 : index
    %c0_2 = arith.constant 0 : index
    %c0_3 = arith.constant 0 : index
    %1 = vector.load %arg2[%c0_1, %c0_2, %c0_3] : memref<2x17x32xbf16, #tpu.memory_space<vmem>>, vector<1x17x32xbf16>
    %2 = vector.shape_cast %1 : vector<1x17x32xbf16> to vector<17x32xbf16>
    %cst = arith.constant dense<0.000000e+00> : vector<17x96xf32>
    %3 = tpu.matmul %2, %0, %cst {dimension_numbers = #tpu.dot_dimension_numbers<[1], [0], [0], [1], [0, 0, 1, 1], [], []>} : vector<17x32xbf16>, vector<32x96xbf16>, vector<17x96xf32> -> vector<17x96xf32>
    %4 = vector.extract_strided_slice %3 {offsets = [0, 0], sizes = [17, 32], strides = [1, 1]} : vector<17x96xf32> to vector<17x32xf32>
    %c0_4 = arith.constant 0 : index
    %c0_5 = arith.constant 0 : index
    %c0_6 = arith.constant 0 : index
    %5 = vector.load %arg7[%c0_4, %c0_5, %c0_6] : memref<2x17x32xf32, #tpu.memory_space<vmem>>, vector<1x17x32xf32>
    %6 = vector.shape_cast %5 : vector<1x17x32xf32> to vector<17x32xf32>
    %7 = vector.shape_cast %4 : vector<17x32xf32> to vector<1x17x32xf32>
    tpu.vector_store %arg7[%c0_4, %c0_5, %c0_6], %7 {strides = array<i32>} : memref<2x17x32xf32, #tpu.memory_space<vmem>>, vector<1x17x32xf32>,
    %8 = vector.extract_strided_slice %3 {offsets = [0, 32], sizes = [17, 32], strides = [1, 1]} : vector<17x96xf32> to vector<17x32xf32>
    %c0_7 = arith.constant 0 : index
    %c0_8 = arith.constant 0 : index
    %c0_9 = arith.constant 0 : index
    %9 = vector.load %arg8[%c0_7, %c0_8, %c0_9] : memref<2x17x32xf32, #tpu.memory_space<vmem>>, vector<1x17x32xf32>
    %10 = vector.shape_cast %9 : vector<1x17x32xf32> to vector<17x32xf32>
    %11 = vector.shape_cast %8 : vector<17x32xf32> to vector<1x17x32xf32>
    tpu.vector_store %arg8[%c0_7, %c0_8, %c0_9], %11 {strides = array<i32>} : memref<2x17x32xf32, #tpu.memory_space<vmem>>, vector<1x17x32xf32>,
    %12 = vector.extract_strided_slice %3 {offsets = [0, 64], sizes = [17, 32], strides = [1, 1]} : vector<17x96xf32> to vector<17x32xf32>
    %c0_10 = arith.constant 0 : index
    %c0_11 = arith.constant 0 : index
    %c0_12 = arith.constant 0 : index
    %13 = vector.load %arg9[%c0_10, %c0_11, %c0_12] : memref<2x17x32xf32, #tpu.memory_space<vmem>>, vector<1x17x32xf32>
    %14 = vector.shape_cast %13 : vector<1x17x32xf32> to vector<17x32xf32>
    %15 = vector.shape_cast %12 : vector<17x32xf32> to vector<1x17x32xf32>
    tpu.vector_store %arg9[%c0_10, %c0_11, %c0_12], %15 {strides = array<i32>} : memref<2x17x32xf32, #tpu.memory_space<vmem>>, vector<1x17x32xf32>,
    %c1 = arith.constant 1 : index
    %c0_13 = arith.constant 0 : index
    %c0_14 = arith.constant 0 : index
    %16 = vector.load %arg2[%c1, %c0_13, %c0_14] : memref<2x17x32xbf16, #tpu.memory_space<vmem>>, vector<1x17x32xbf16>
    %17 = vector.shape_cast %16 : vector<1x17x32xbf16> to vector<17x32xbf16>
    %cst_15 = arith.constant dense<0.000000e+00> : vector<17x96xf32>
    %18 = tpu.matmul %17, %0, %cst_15 {dimension_numbers = #tpu.dot_dimension_numbers<[1], [0], [0], [1], [0, 0, 1, 1], [], []>} : vector<17x32xbf16>, vector<32x96xbf16>, vector<17x96xf32> -> vector<17x96xf32>
    %19 = vector.extract_strided_slice %18 {offsets = [0, 0], sizes = [17, 32], strides = [1, 1]} : vector<17x96xf32> to vector<17x32xf32>
    %c1_16 = arith.constant 1 : index
    %c0_17 = arith.constant 0 : index
    %c0_18 = arith.constant 0 : index
    %20 = vector.load %arg7[%c1_16, %c0_17, %c0_18] : memref<2x17x32xf32, #tpu.memory_space<vmem>>, vector<1x17x32xf32>
    %21 = vector.shape_cast %20 : vector<1x17x32xf32> to vector<17x32xf32>
    %22 = vector.shape_cast %19 : vector<17x32xf32> to vector<1x17x32xf32>
    tpu.vector_store %arg7[%c1_16, %c0_17, %c0_18], %22 {strides = array<i32>} : memref<2x17x32xf32, #tpu.memory_space<vmem>>, vector<1x17x32xf32>,
    %23 = vector.extract_strided_slice %18 {offsets = [0, 32], sizes = [17, 32], strides = [1, 1]} : vector<17x96xf32> to vector<17x32xf32>
    %c1_19 = arith.constant 1 : index
    %c0_20 = arith.constant 0 : index
    %c0_21 = arith.constant 0 : index
    %24 = vector.load %arg8[%c1_19, %c0_20, %c0_21] : memref<2x17x32xf32, #tpu.memory_space<vmem>>, vector<1x17x32xf32>
    %25 = vector.shape_cast %24 : vector<1x17x32xf32> to vector<17x32xf32>
    %26 = vector.shape_cast %23 : vector<17x32xf32> to vector<1x17x32xf32>
    tpu.vector_store %arg8[%c1_19, %c0_20, %c0_21], %26 {strides = array<i32>} : memref<2x17x32xf32, #tpu.memory_space<vmem>>, vector<1x17x32xf32>,
    %27 = vector.extract_strided_slice %18 {offsets = [0, 64], sizes = [17, 32], strides = [1, 1]} : vector<17x96xf32> to vector<17x32xf32>
    %c1_22 = arith.constant 1 : index
    %c0_23 = arith.constant 0 : index
    %c0_24 = arith.constant 0 : index
    %28 = vector.load %arg9[%c1_22, %c0_23, %c0_24] : memref<2x17x32xf32, #tpu.memory_space<vmem>>, vector<1x17x32xf32>
    %29 = vector.shape_cast %28 : vector<1x17x32xf32> to vector<17x32xf32>
    %30 = vector.shape_cast %27 : vector<17x32xf32> to vector<1x17x32xf32>
    tpu.vector_store %arg9[%c1_22, %c0_23, %c0_24], %30 {strides = array<i32>} : memref<2x17x32xf32, #tpu.memory_space<vmem>>, vector<1x17x32xf32>,
    %c0_25 = arith.constant 0 : index
    %c0_26 = arith.constant 0 : index
    %c0_27 = arith.constant 0 : index
    %31 = vector.load %arg7[%c0_25, %c0_26, %c0_27] : memref<2x17x32xf32, #tpu.memory_space<vmem>>, vector<2x17x32xf32>
    %c0_28 = arith.constant 0 : index
    %c0_29 = arith.constant 0 : index
    %c0_30 = arith.constant 0 : index
    %32 = vector.load %arg8[%c0_28, %c0_29, %c0_30] : memref<2x17x32xf32, #tpu.memory_space<vmem>>, vector<2x17x32xf32>
    %c0_31 = arith.constant 0 : index
    %c0_32 = arith.constant 0 : index
    %c0_33 = arith.constant 0 : index
    %33 = vector.load %arg9[%c0_31, %c0_32, %c0_33] : memref<2x17x32xf32, #tpu.memory_space<vmem>>, vector<2x17x32xf32>
    %c0_34 = arith.constant 0 : index
    %c0_35 = arith.constant 0 : index
    %34 = vector.load %arg1[%c0_34, %c0_35] : memref<2x32xf32, #tpu.memory_space<vmem>>, vector<2x32xf32>
    %c0_36 = arith.constant 0 : index
    %c0_37 = arith.constant 0 : index
    %35 = vector.load %arg3[%c0_36, %c0_37] : memref<2x17xf32, #tpu.memory_space<vmem>>, vector<2x17xf32>
    %cst_38 = arith.constant -1.000000e+09 : f32
    %36 = vector.broadcast %cst_38 : f32 to vector<2x17xf32>
    %37 = arith.mulf %35, %36 : vector<2x17xf32>
    %38 = vector.shape_cast %34 : vector<2x32xf32> to vector<2x1x32xf32>
    %39 = vector.broadcast %38 : vector<2x1x32xf32> to vector<2x17x32xf32>
    %40 = arith.mulf %39, %31 : vector<2x17x32xf32>
    %cst_39 = arith.constant dense<0.000000e+00> : vector<2x17xf32>
    %41 = vector.multi_reduction <add>, %40, %cst_39 [2] : vector<2x17x32xf32> to vector<2x17xf32>
    %cst_40 = arith.constant 0.176776692 : f32
    %42 = vector.broadcast %cst_40 : f32 to vector<2x17xf32>
    %43 = arith.mulf %41, %42 : vector<2x17xf32>
    %44 = arith.addf %43, %37 : vector<2x17xf32>
    %cst_41 = arith.constant dense<0xFF800000> : vector<2xf32>
    %45 = vector.multi_reduction <maximumf>, %44, %cst_41 [1] : vector<2x17xf32> to vector<2xf32>
    %46 = vector.shape_cast %45 : vector<2xf32> to vector<2x1xf32>
    %47 = vector.broadcast %46 : vector<2x1xf32> to vector<2x17xf32>
    %48 = arith.subf %44, %47 : vector<2x17xf32>
    %49 = math.exp %48 : vector<2x17xf32>
    %cst_42 = arith.constant dense<0.000000e+00> : vector<2xf32>
    %50 = vector.multi_reduction <add>, %49, %cst_42 [1] : vector<2x17xf32> to vector<2xf32>
    %51 = vector.shape_cast %50 : vector<2xf32> to vector<2x1xf32>
    %52 = tpu.reciprocal %51 {approx = true} : vector<2x1xf32> -> vector<2x1xf32>
    %53 = vector.broadcast %52 : vector<2x1xf32> to vector<2x17xf32>
    %54 = arith.mulf %49, %53 : vector<2x17xf32>
    %55 = vector.shape_cast %54 : vector<2x17xf32> to vector<2x17x1xf32>
    %56 = vector.broadcast %55 : vector<2x17x1xf32> to vector<2x17x32xf32>
    %57 = arith.mulf %56, %32 : vector<2x17x32xf32>
    %cst_43 = arith.constant dense<0.000000e+00> : vector<2x32xf32>
    %58 = vector.multi_reduction <add>, %57, %cst_43 [1] : vector<2x17x32xf32> to vector<2x32xf32>
    %59 = arith.truncf %58 : vector<2x32xf32> to vector<2x32xbf16>
    %c0_44 = arith.constant 0 : index
    %c0_45 = arith.constant 0 : index
    %60 = vector.load %arg5[%c0_44, %c0_45] : memref<32x32xbf16, #tpu.memory_space<vmem>>, vector<32x32xbf16>
    %cst_46 = arith.constant dense<0.000000e+00> : vector<2x32xf32>
    %61 = tpu.matmul %59, %60, %cst_46 {dimension_numbers = #tpu.dot_dimension_numbers<[1], [0], [0], [1], [0, 0, 1, 1], [], []>} : vector<2x32xbf16>, vector<32x32xbf16>, vector<2x32xf32> -> vector<2x32xf32>
    %62 = vector.shape_cast %61 : vector<2x32xf32> to vector<2x1x32xf32>
    %63 = vector.broadcast %62 : vector<2x1x32xf32> to vector<2x17x32xf32>
    %64 = arith.mulf %63, %33 : vector<2x17x32xf32>
    %cst_47 = arith.constant dense<0.000000e+00> : vector<2x17xf32>
    %65 = vector.multi_reduction <add>, %64, %cst_47 [2] : vector<2x17x32xf32> to vector<2x17xf32>
    %cst_48 = arith.constant 0.176776692 : f32
    %66 = vector.broadcast %cst_48 : f32 to vector<2x17xf32>
    %67 = arith.mulf %65, %66 : vector<2x17xf32>
    %68 = math.tanh %67 : vector<2x17xf32>
    %cst_49 = arith.constant 1.000000e+01 : f32
    %69 = vector.broadcast %cst_49 : f32 to vector<2x17xf32>
    %70 = arith.mulf %69, %68 : vector<2x17xf32>
    %71 = arith.addf %70, %37 : vector<2x17xf32>
    %cst_50 = arith.constant dense<0xFF800000> : vector<2xf32>
    %72 = vector.multi_reduction <maximumf>, %71, %cst_50 [1] : vector<2x17xf32> to vector<2xf32>
    %73 = vector.shape_cast %72 : vector<2xf32> to vector<2x1xf32>
    %74 = vector.broadcast %73 : vector<2x1xf32> to vector<2x17xf32>
    %75 = arith.subf %71, %74 : vector<2x17xf32>
    %76 = math.exp %75 : vector<2x17xf32>
    %cst_51 = arith.constant dense<0.000000e+00> : vector<2xf32>
    %77 = vector.multi_reduction <add>, %76, %cst_51 [1] : vector<2x17xf32> to vector<2xf32>
    %78 = vector.shape_cast %77 : vector<2xf32> to vector<2x1xf32>
    %79 = tpu.reciprocal %78 {approx = true} : vector<2x1xf32> -> vector<2x1xf32>
    %80 = vector.broadcast %79 : vector<2x1xf32> to vector<2x17xf32>
    %81 = arith.mulf %76, %80 : vector<2x17xf32>
    %c0_52 = arith.constant 0 : index
    %c0_53 = arith.constant 0 : index
    %82 = vector.load %arg6[%c0_52, %c0_53] : memref<2x17xf32, #tpu.memory_space<vmem>>, vector<2x17xf32>
    tpu.vector_store %arg6[%c0_52, %c0_53], %81 {strides = array<i32>} : memref<2x17xf32, #tpu.memory_space<vmem>>, vector<2x17xf32>,
    return
  }
  func.func @transform_0(%arg0: i32) -> (i32, i32) {
    %c0_i32 = arith.constant 0 : i32
    %c0_i32_0 = arith.constant 0 : i32
    return %arg0, %c0_i32 : i32, i32
  }
  func.func @transform_1(%arg0: i32) -> (i32, i32, i32) {
    %c0_i32 = arith.constant 0 : i32
    %c0_i32_0 = arith.constant 0 : i32
    %c0_i32_1 = arith.constant 0 : i32
    return %arg0, %c0_i32, %c0_i32_0 : i32, i32, i32
  }
  func.func @transform_2(%arg0: i32) -> (i32, i32) {
    %c0_i32 = arith.constant 0 : i32
    %c0_i32_0 = arith.constant 0 : i32
    return %arg0, %c0_i32 : i32, i32
  }
  func.func @transform_3(%arg0: i32) -> (i32, i32) {
    %c0_i32 = arith.constant 0 : i32
    %c0_i32_0 = arith.constant 0 : i32
    %c0_i32_1 = arith.constant 0 : i32
    return %c0_i32, %c0_i32_0 : i32, i32
  }
  func.func @transform_4(%arg0: i32) -> (i32, i32) {
    %c0_i32 = arith.constant 0 : i32
    %c0_i32_0 = arith.constant 0 : i32
    %c0_i32_1 = arith.constant 0 : i32
    return %c0_i32, %c0_i32_0 : i32, i32
  }
  func.func @transform_5(%arg0: i32) -> (i32, i32) {
    %c0_i32 = arith.constant 0 : i32
    %c0_i32_0 = arith.constant 0 : i32
    return %arg0, %c0_i32 : i32, i32
  }
}

</mosaic_0001>

<llo_original>
// kernel: het_flat_decoder_forward.1
$region0: #{het_flat_decoder_forward.1}
  #allocation0 [shape = 'u32[]', space=smem, size = 0x4, offset = 0x4, fixed_abs, tag = 'smem constant byte address 0x4 - core index']
  #allocation1 [shape = 'u32[144,128]{1,0:T(1,128)}', space=vmem, size = 0x12000, scoped, tag = 'internal scratch']
  #allocation2 [shape = 'f32[2,17,32]{2,1,0:T(8,128)}', space=vmem, size = 0x6000, scoped, tag = 'scratch operand']
  #allocation3 [shape = 'f32[2,17,32]{2,1,0:T(8,128)}', space=vmem, size = 0x6000, scoped, tag = 'scratch operand']
  #allocation4 [shape = 'f32[2,17,32]{2,1,0:T(8,128)}', space=vmem, size = 0x6000, scoped, tag = 'scratch operand']
  %s0 = inlined_call_operand.vmem [shape: f32[2,32], index: 0, kind: input, shape index: {}]
  %s1 = inlined_call_operand.vmem [shape: bf16[2,17,32], index: 1, kind: input, shape index: {}]
  %s2 = inlined_call_operand.vmem [shape: f32[2,17], index: 2, kind: input, shape index: {}]
  %s3 = inlined_call_operand.vmem [shape: bf16[32,96], index: 3, kind: input, shape index: {}]
  %s4 = inlined_call_operand.vmem [shape: bf16[32,32], index: 4, kind: input, shape index: {}]
  %s5 = inlined_call_operand.vmem [shape: f32[2,17], index: 5, kind: output, shape index: {}]
  %s6 = sld [smem:[#allocation0]]
  $region30: #{het_flat_decoder_forward.1} parent=0
    _
  %s8 = ssub.s32 1, %s6
  %s9 = scalar_select 0, %s8, %s6
  // Predicated region
  $region2: #{het_flat_decoder_forward.1} parent=0 // pred_check
    _
  $region3: #{het_flat_decoder_forward.1} parent=0 // pred_check_branch
    %11 = sbr.rel (0) target = $region5
  $region4: #{het_flat_decoder_forward.1} parent=0 // pred_region
    _
  $region5: #{het_flat_decoder_forward.1} parent=0 // pred_fallthru
    _
  // Predicated region
  $region6: #{het_flat_decoder_forward.1} parent=0 // pred_check
    _
  $region7: #{het_flat_decoder_forward.1} parent=0 // pred_check_branch
    %13 = sbr.rel (0) target = $region9
  $region8: #{het_flat_decoder_forward.1} parent=0 // pred_region
    _
  $region9: #{het_flat_decoder_forward.1} parent=0 // pred_fallthru
    _
  // Predicated region
  $region10: #{het_flat_decoder_forward.1} parent=0 // pred_check
    _
  $region11: #{het_flat_decoder_forward.1} parent=0 // pred_check_branch
    %15 = sbr.rel (0) target = $region13
  $region12: #{het_flat_decoder_forward.1} parent=0 // pred_region
    _
  $region13: #{het_flat_decoder_forward.1} parent=0 // pred_fallthru
    _
  // Predicated region
  $region14: #{het_flat_decoder_forward.1} parent=0 // pred_check
    _
  $region15: #{het_flat_decoder_forward.1} parent=0 // pred_check_branch
    %17 = sbr.rel (0) target = $region17
  $region16: #{het_flat_decoder_forward.1} parent=0 // pred_region
    _
  $region17: #{het_flat_decoder_forward.1} parent=0 // pred_fallthru
    _
  // Predicated region
  $region18: #{het_flat_decoder_forward.1} parent=0 // pred_check
    _
  $region19: #{het_flat_decoder_forward.1} parent=0 // pred_check_branch
    %19 = sbr.rel (0) target = $region21
  $region20: #{het_flat_decoder_forward.1} parent=0 // pred_region
    _
  $region21: #{het_flat_decoder_forward.1} parent=0 // pred_fallthru
    _
  %v21 = vld [vmem:[%s3] sm:$0xf]
  %v22 = vld [vmem:[%s3 + $0x4] sm:$0xf]
  %v23 = vld [vmem:[%s3 + $0x8] sm:$0xf]
  %v24 = vld [vmem:[%s3 + $0xc] sm:$0xf]
  %v25 = vld [vmem:[%s1] sm:$0xf]
  %v26 = vld [vmem:[%s1 + $0x4] sm:$0xf]
  %v27 = vld [vmem:[%s1 + $0x8] sm:$0x1]
  %v31 = vunpack.c.l.b16 %v25
  %v32 = vunpack.c.l.b16 %v26
  %v33 = vunpack.c.l.b16 %v27
  %v34 = vpack.c.b16 %v32, %v31
  %v35 = vpack.c.b16 %v33, %v33
  %v40 = vunpack.c.l.b16 %v21
  %v41 = vunpack.c.l.b16 %v22
  %v42 = vunpack.c.l.b16 %v23
  %v43 = vunpack.c.l.b16 %v24
  %v44 = vpack.c.b16 %v41, %v40
  %v45 = vpack.c.b16 %v43, %v42
  %vm48 = vcmask 261120
  %v50 = vsel %vm48, %v34, 0
  %v53 = vsel %vm48, %v35, 0
  %55 = vmatprep.subr.bf16.mxu0 0
  %56 = vmatpush1.bf16.msra.mxu0 %v44
  %57 = vmatprep.subr.bf16.mxu0 0
  %58 = vmatpush1.bf16.msra.mxu0 %v45
  %59 = vmatprep.subr.bf16.mxu0 0
  %60 = vmatpush1.bf16.msra.mxu0 0
  %61 = vmatprep.subr.bf16.mxu0 0
  %62 = vmatpush1.bf16.msra.mxu0 0
  %63 = vmatprep.subr.bf16.mxu0 0
  %64 = vmatpush1.bf16.msra.mxu0 0
  %65 = vmatprep.subr.bf16.mxu0 0
  %66 = vmatpush1.bf16.msra.mxu0 0
  %67 = vmatprep.subr.bf16.mxu0 0
  %68 = vmatpush1.bf16.msra.mxu0 0
  %69 = vmatprep.subr.bf16.mxu0 0
  %70 = vmatpush1.bf16.msra.mxu0 0
  %71 = vmatprep.subr.bf16.mxu0 0
  %72 = vmatpush1.bf16.msra.mxu0 0
  %73 = vmatprep.subr.bf16.mxu0 0
  %74 = vmatpush1.bf16.msra.mxu0 0
  %75 = vmatprep.subr.bf16.mxu0 0
  %76 = vmatpush1.bf16.msra.mxu0 0
  %77 = vmatprep.subr.bf16.mxu0 0
  %78 = vmatpush1.bf16.msra.mxu0 0
  %79 = vmatprep.subr.bf16.mxu0 0
  %80 = vmatpush1.bf16.msra.mxu0 0
  %81 = vmatprep.subr.bf16.mxu0 0
  %82 = vmatpush1.bf16.msra.mxu0 0
  %83 = vmatprep.subr.bf16.mxu0 0
  %84 = vmatpush1.bf16.msra.mxu0 0
  %85 = vmatprep.subr.bf16.mxu0 0
  %86 = vmatpush1.bf16.msra.mxu0 0
  %87 = vmatprep.mubr.bf16.mxu0 0
  %88 = vmatmul.mubr.bf16.gmra.mrb[0].mxu0 %v50
  %v89 = vpop.f32.mrb[0].mxu0
  %v90 = vadd.f32 0.0, %v89
  %v91 = vpop.f32.mrb[0].mxu0
  %v92 = vpop.f32.mrb[0].mxu0
  %v93 = vadd.f32 0.0, %v92
  %v94 = vpop.f32.mrb[0].mxu0
  %95 = vmatprep.mubr.bf16.mxu0 0
  %96 = vmatmul.mubr.bf16.gmra.mrb[0].mxu0 %v53
  %v97 = vpop.f32.mrb[0].mxu0
  %v98 = vadd.f32 0.0, %v97
  %v99 = vpop.f32.mrb[0].mxu0
  %v100 = vpop.f32.mrb[0].mxu0
  %v101 = vpop.f32.mrb[0].mxu0
  %102 = vdwg.mxu0
  %103 = vst.msk [vmem:[#allocation2] sm:$0xff] %vm48, %v90
  %104 = vst.msk [vmem:[#allocation2 + $0x8] sm:$0xff] %vm48, %v93
  %vm105 = vcmask 253952
  %106 = vst.msk [vmem:[#allocation2 + $0x10] sm:$0x1] %vm105, %v98
  %110 = vrot.lane.b32.xlu0 %v90, 96
  %v111 = vpop.permute.xlu0 %110
  %112 = vrot.lane.b32.xlu0 %v93, 96
  %v113 = vpop.permute.xlu0 %112
  %114 = vrot.lane.b32.xlu0 %v98, 96
  %v115 = vpop.permute.xlu0 %114
  %119 = vst.msk [vmem:[#allocation3] sm:$0xff] %vm48, %v111
  %120 = vst.msk [vmem:[#allocation3 + $0x8] sm:$0xff] %vm48, %v113
  %121 = vst.msk [vmem:[#allocation3 + $0x10] sm:$0x1] %vm105, %v115
  %122 = vrot.lane.b32.xlu0 %v90, 64
  %v123 = vpop.permute.xlu0 %122
  %124 = vrot.lane.b32.xlu0 %v93, 64
  %v125 = vpop.permute.xlu0 %124
  %126 = vrot.lane.b32.xlu0 %v98, 64
  %v127 = vpop.permute.xlu0 %126
  %131 = vst.msk [vmem:[#allocation4] sm:$0xff] %vm48, %v123
  %132 = vst.msk [vmem:[#allocation4 + $0x8] sm:$0xff] %vm48, %v125
  %133 = vst.msk [vmem:[#allocation4 + $0x10] sm:$0x1] %vm105, %v127
  %s134 = scalar_lea.vmem %s1, 12
  %v135 = vld [vmem:[%s134] sm:$0xf]
  %v136 = vld [vmem:[%s134 + $0x4] sm:$0xf]
  %v137 = vld [vmem:[%s134 + $0x8] sm:$0x1]
  %v141 = vunpack.c.l.b16 %v135
  %v142 = vunpack.c.l.b16 %v136
  %v143 = vunpack.c.l.b16 %v137
  %v144 = vpack.c.b16 %v142, %v141
  %v145 = vpack.c.b16 %v143, %v143
  %v147 = vsel %vm48, %v144, 0
  %v150 = vsel %vm48, %v145, 0
  %152 = vmatprep.subr.bf16.mxu0 0
  %153 = vmatpush1.bf16.msra.mxu0 %v44
  %154 = vmatprep.subr.bf16.mxu0 0
  %155 = vmatpush1.bf16.msra.mxu0 %v45
  %156 = vmatprep.subr.bf16.mxu0 0
  %157 = vmatpush1.bf16.msra.mxu0 0
  %158 = vmatprep.subr.bf16.mxu0 0
  %159 = vmatpush1.bf16.msra.mxu0 0
  %160 = vmatprep.subr.bf16.mxu0 0
  %161 = vmatpush1.bf16.msra.mxu0 0
  %162 = vmatprep.subr.bf16.mxu0 0
  %163 = vmatpush1.bf16.msra.mxu0 0
  %164 = vmatprep.subr.bf16.mxu0 0
  %165 = vmatpush1.bf16.msra.mxu0 0
  %166 = vmatprep.subr.bf16.mxu0 0
  %167 = vmatpush1.bf16.msra.mxu0 0
  %168 = vmatprep.subr.bf16.mxu0 0
  %169 = vmatpush1.bf16.msra.mxu0 0
  %170 = vmatprep.subr.bf16.mxu0 0
  %171 = vmatpush1.bf16.msra.mxu0 0
  %172 = vmatprep.subr.bf16.mxu0 0
  %173 = vmatpush1.bf16.msra.mxu0 0
  %174 = vmatprep.subr.bf16.mxu0 0
  %175 = vmatpush1.bf16.msra.mxu0 0
  %176 = vmatprep.subr.bf16.mxu0 0
  %177 = vmatpush1.bf16.msra.mxu0 0
  %178 = vmatprep.subr.bf16.mxu0 0
  %179 = vmatpush1.bf16.msra.mxu0 0
  %180 = vmatprep.subr.bf16.mxu0 0
  %181 = vmatpush1.bf16.msra.mxu0 0
  %182 = vmatprep.subr.bf16.mxu0 0
  %183 = vmatpush1.bf16.msra.mxu0 0
  %184 = vmatprep.mubr.bf16.mxu0 0
  %185 = vmatmul.mubr.bf16.gmra.mrb[0].mxu0 %v147
  %v186 = vpop.f32.mrb[0].mxu0
  %v187 = vadd.f32 0.0, %v186
  %v188 = vpop.f32.mrb[0].mxu0
  %v189 = vpop.f32.mrb[0].mxu0
  %v190 = vadd.f32 0.0, %v189
  %v191 = vpop.f32.mrb[0].mxu0
  %192 = vmatprep.mubr.bf16.mxu0 0
  %193 = vmatmul.mubr.bf16.gmra.mrb[0].mxu0 %v150
  %v194 = vpop.f32.mrb[0].mxu0
  %v195 = vadd.f32 0.0, %v194
  %v196 = vpop.f32.mrb[0].mxu0
  %v197 = vpop.f32.mrb[0].mxu0
  %v198 = vpop.f32.mrb[0].mxu0
  %199 = vdwg.mxu0
  %s200 = scalar_lea.vmem [#allocation2], 24
  %201 = vst.msk [vmem:[%s200] sm:$0xff] %vm48, %v187
  %202 = vst.msk [vmem:[%s200 + $0x8] sm:$0xff] %vm48, %v190
  %203 = vst.msk [vmem:[%s200 + $0x10] sm:$0x1] %vm105, %v195
  %207 = vrot.lane.b32.xlu0 %v187, 96
  %v208 = vpop.permute.xlu0 %207
  %209 = vrot.lane.b32.xlu0 %v190, 96
  %v210 = vpop.permute.xlu0 %209
  %211 = vrot.lane.b32.xlu0 %v195, 96
  %v212 = vpop.permute.xlu0 %211
  %s216 = scalar_lea.vmem [#allocation3], 24
  %217 = vst.msk [vmem:[%s216] sm:$0xff] %vm48, %v208
  %218 = vst.msk [vmem:[%s216 + $0x8] sm:$0xff] %vm48, %v210
  %219 = vst.msk [vmem:[%s216 + $0x10] sm:$0x1] %vm105, %v212
  %220 = vrot.lane.b32.xlu0 %v187, 64
  %v221 = vpop.permute.xlu0 %220
  %222 = vrot.lane.b32.xlu0 %v190, 64
  %v223 = vpop.permute.xlu0 %222
  %224 = vrot.lane.b32.xlu0 %v195, 64
  %v225 = vpop.permute.xlu0 %224
  %s229 = scalar_lea.vmem [#allocation4], 24
  %230 = vst.msk [vmem:[%s229] sm:$0xff] %vm48, %v221
  %231 = vst.msk [vmem:[%s229 + $0x8] sm:$0xff] %vm48, %v223
  %232 = vst.msk [vmem:[%s229 + $0x10] sm:$0x1] %vm105, %v225
  %v233 = vld [vmem:[#allocation2] sm:$0xff]
  %v234 = vld [vmem:[#allocation2 + $0x8] sm:$0xff]
  %v235 = vld [vmem:[#allocation2 + $0x10] sm:$0x1]
  %v236 = vld [vmem:[#allocation2 + $0x18] sm:$0xff]
  %v237 = vld [vmem:[#allocation2 + $0x20] sm:$0xff]
  %v238 = vld [vmem:[#allocation2 + $0x28] sm:$0x1]
  %v239 = vld [vmem:[#allocation3] sm:$0xff]
  %v240 = vld [vmem:[#allocation3 + $0x8] sm:$0xff]
  %v241 = vld [vmem:[#allocation3 + $0x10] sm:$0x1]
  %v242 = vld [vmem:[#allocation3 + $0x18] sm:$0xff]
  %v243 = vld [vmem:[#allocation3 + $0x20] sm:$0xff]
  %v244 = vld [vmem:[#allocation3 + $0x28] sm:$0x1]
  %v245 = vld [vmem:[#allocation4] sm:$0xff]
  %v246 = vld [vmem:[#allocation4 + $0x8] sm:$0xff]
  %v247 = vld [vmem:[#allocation4 + $0x10] sm:$0x1]
  %v248 = vld [vmem:[#allocation4 + $0x18] sm:$0xff]
  %v249 = vld [vmem:[#allocation4 + $0x20] sm:$0xff]
  %v250 = vld [vmem:[#allocation4 + $0x28] sm:$0x1]
  %v251 = vld [vmem:[%s0] sm:$0x3]
  %v252 = vld [vmem:[%s2] sm:$0x3]
  %v253 = vmul.f32 %v252, -1e+09
  %v256 = vunpack.c.l.s4 1966171168
  %v257 = vunpack.c.0.s8 %v256
  %v258 = vlaneseq
  %v259 = vshrl.u32 %v258, 7
  %v260 = vsub.s32 %v257, %v259
  %v261 = vrot.slane %v251, %v260
  %v262 = vcombine.high %v261, %v261
  %v264 = vunpack.c.l.s4 1966171168
  %v265 = vunpack.c.0.s8 %v264
  %v266 = vlaneseq
  %v267 = vshrl.u32 %v266, 7
  %v268 = vsub.s32 %v265, %v267
  %v269 = vrot.slane %v261, %v268
  %v271 = vunpack.c.l.s4 1966171168
  %v272 = vunpack.c.0.s8 %v271
  %v273 = vlaneseq
  %v274 = vshrl.u32 %v273, 7
  %v275 = vsub.s32 %v272, %v274
  %v276 = vrot.slane %v262, %v275
  %v277 = vlaneseq
  %v278 = vshrl.u32 %v277, 7
  %v279 = vsub.s32 0, %v278
  %v280 = vrot.slane %v269, %v279
  %v281 = vlaneseq
  %v282 = vshrl.u32 %v281, 7
  %v283 = vsub.s32 0, %v282
  %v284 = vrot.slane %v276, %v283
  %v287 = vmul.f32 %v280, %v233
  %v288 = vmul.f32 %v280, %v234
  %v289 = vmul.f32 %v280, %v235
  %v290 = vmul.f32 %v284, %v236
  %v291 = vmul.f32 %v284, %v237
  %v292 = vmul.f32 %v284, %v238
  %v293 = vsel %vm48, %v287, 0.0
  %294 = vadd.xlane.f32.xlu0 %v293
  %v295 = vpop.xlane.xlu0 %294
  %v296 = vsel %vm48, %v288, 0.0
  %297 = vadd.xlane.f32.xlu0 %v296
  %v298 = vpop.xlane.xlu0 %297
  %v299 = vsel %vm105, %v289, 0.0
  %300 = vadd.xlane.f32.xlu0 %v299
  %v301 = vpop.xlane.xlu0 %300
  %v302 = vsel %vm48, %v290, 0.0
  %303 = vadd.xlane.f32.xlu0 %v302
  %v304 = vpop.xlane.xlu0 %303
  %v305 = vsel %vm48, %v291, 0.0
  %306 = vadd.xlane.f32.xlu0 %v305
  %v307 = vpop.xlane.xlu0 %306
  %v308 = vsel %vm105, %v292, 0.0
  %309 = vadd.xlane.f32.xlu0 %v308
  %v310 = vpop.xlane.xlu0 %309
  %v311 = vmul.f32 %v295, 0.17677669
  %v312 = vmul.f32 %v298, 0.17677669
  %v313 = vmul.f32 %v301, 0.17677669
  %v314 = vmul.f32 %v304, 0.17677669
  %v315 = vmul.f32 %v307, 0.17677669
  %v316 = vmul.f32 %v310, 0.17677669
  %v318 = vlaneseq
  %v319 = vshrl.u32 %v318, 7
  %v320 = vsub.s32 0, %v319
  %v321 = vrot.slane %v253, %v320
  %323 = vbcast.lane.b32.xlu0 %v321, 256
  %v324 = vpop.permute.xlu0 %323
  %s326 = sor.u32 256, 8
  %327 = vbcast.lane.b32.xlu0 %v321, %s326
  %v328 = vpop.permute.xlu0 %327
  %s330 = sor.u32 256, 16
  %331 = vbcast.lane.b32.xlu0 %v321, %s330
  %v332 = vpop.permute.xlu0 %331
  %v333 = vlaneseq
  %v334 = vshrl.u32 %v333, 7
  %v335 = vsub.s32 1, %v334
  %v336 = vrot.slane %v253, %v335
  %338 = vbcast.lane.b32.xlu0 %v336, 256
  %v339 = vpop.permute.xlu0 %338
  %s341 = sor.u32 256, 8
  %342 = vbcast.lane.b32.xlu0 %v336, %s341
  %v343 = vpop.permute.xlu0 %342
  %s345 = sor.u32 256, 16
  %346 = vbcast.lane.b32.xlu0 %v336, %s345
  %v347 = vpop.permute.xlu0 %346
  %v354 = vadd.f32 %v311, %v324
  %v355 = vadd.f32 %v312, %v328
  %v356 = vadd.f32 %v313, %v332
  %v357 = vadd.f32 %v314, %v339
  %v358 = vadd.f32 %v315, %v343
  %v359 = vadd.f32 %v316, %v347
  %366 = vset.pattern.permute.xlu0 0
  %367 = vperm.xlu0 %366, %v354
  %v368 = vpop.permute.xlu0 %367
  %369 = vset.pattern.permute.xlu0 0
  %370 = vperm.xlu0 %369, %v355
  %v371 = vpop.permute.xlu0 %370
  %372 = vset.pattern.permute.xlu0 0
  %373 = vperm.xlu0 %372, %v356
  %v374 = vpop.permute.xlu0 %373
  %375 = vset.pattern.permute.xlu0 0
  %376 = vperm.xlu0 %375, %v357
  %v377 = vpop.permute.xlu0 %376
  %378 = vset.pattern.permute.xlu0 0
  %379 = vperm.xlu0 %378, %v358
  %v380 = vpop.permute.xlu0 %379
  %381 = vset.pattern.permute.xlu0 0
  %382 = vperm.xlu0 %381, %v359
  %v383 = vpop.permute.xlu0 %382
  %v384 = vlaneseq
  %v385 = vand.u32 %v384, 127
  %v386 = vlaneseq
  %v387 = vshrl.u32 %v386, 7
  %v388 = vsub.s32 %v385, %v387
  %v389 = vrot.slane %v368, %v388
  %v390 = vadd.s32 %v385, 4294967288
  %v391 = vlaneseq
  %v392 = vshrl.u32 %v391, 7
  %v393 = vsub.s32 %v390, %v392
  %v394 = vrot.slane %v371, %v393
  %vm395 = vcmask 130112
  %v396 = vsel %vm395, %v394, %v389
  %v397 = vadd.s32 %v385, 4294967280
  %v398 = vlaneseq
  %v399 = vshrl.u32 %v398, 7
  %v400 = vsub.s32 %v397, %v399
  %v401 = vrot.slane %v374, %v400
  %vm402 = vcmask 195712
  %v403 = vsel %vm402, %v401, %v396
  %v404 = vlaneseq
  %v405 = vshrl.u32 %v404, 7
  %v406 = vsub.s32 %v385, %v405
  %v407 = vrot.slane %v377, %v406
  %v408 = vlaneseq
  %v409 = vshrl.u32 %v408, 7
  %v410 = vsub.s32 %v390, %v409
  %v411 = vrot.slane %v380, %v410
  %v412 = vsel %vm395, %v411, %v407
  %v413 = vlaneseq
  %v414 = vshrl.u32 %v413, 7
  %v415 = vsub.s32 %v397, %v414
  %v416 = vrot.slane %v383, %v415
  %v417 = vsel %vm402, %v416, %v412
  %vm418 = vcmask 1041409
  %v419 = vsel %vm418, %v417, %v403
  %vm421 = vcmask 132096
  %v422 = vsel %vm421, %v419, -inf
  %423 = vmax.xlane.f32.xlu0 %v422
  %v424 = vpop.xlane.xlu0 %423
  %v426 = vlaneseq
  %v427 = vshrl.u32 %v426, 7
  %v428 = vsub.s32 0, %v427
  %v429 = vrot.slane %v424, %v428
  %v430 = vlaneseq
  %v431 = vshrl.u32 %v430, 7
  %v432 = vsub.s32 1, %v431
  %v433 = vrot.slane %v424, %v432
  %v436 = vsub.f32 %v354, %v429
  %v437 = vsub.f32 %v355, %v429
  %v438 = vsub.f32 %v356, %v429
  %v439 = vsub.f32 %v357, %v433
  %v440 = vsub.f32 %v358, %v433
  %v441 = vsub.f32 %v359, %v433
  %v442 = vmul.f32 %v436, 1.442695
  %v443 = vpow.pop %v442
  %v444 = vmul.f32 %v437, 1.442695
  %v445 = vpow.pop %v444
  %v446 = vmul.f32 %v438, 1.442695
  %v447 = vpow.pop %v446
  %v448 = vmul.f32 %v439, 1.442695
  %v449 = vpow.pop %v448
  %v450 = vmul.f32 %v440, 1.442695
  %v451 = vpow.pop %v450
  %v452 = vmul.f32 %v441, 1.442695
  %v453 = vpow.pop %v452
  %460 = vset.pattern.permute.xlu0 0
  %461 = vperm.xlu0 %460, %v443
  %v462 = vpop.permute.xlu0 %461
  %463 = vset.pattern.permute.xlu0 0
  %464 = vperm.xlu0 %463, %v445
  %v465 = vpop.permute.xlu0 %464
  %466 = vset.pattern.permute.xlu0 0
  %467 = vperm.xlu0 %466, %v447
  %v468 = vpop.permute.xlu0 %467
  %469 = vset.pattern.permute.xlu0 0
  %470 = vperm.xlu0 %469, %v449
  %v471 = vpop.permute.xlu0 %470
  %472 = vset.pattern.permute.xlu0 0
  %473 = vperm.xlu0 %472, %v451
  %v474 = vpop.permute.xlu0 %473
  %475 = vset.pattern.permute.xlu0 0
  %476 = vperm.xlu0 %475, %v453
  %v477 = vpop.permute.xlu0 %476
  %v478 = vlaneseq
  %v479 = vshrl.u32 %v478, 7
  %v480 = vsub.s32 %v385, %v479
  %v481 = vrot.slane %v462, %v480
  %v482 = vlaneseq
  %v483 = vshrl.u32 %v482, 7
  %v484 = vsub.s32 %v390, %v483
  %v485 = vrot.slane %v465, %v484
  %v486 = vsel %vm395, %v485, %v481
  %v487 = vlaneseq
  %v488 = vshrl.u32 %v487, 7
  %v489 = vsub.s32 %v397, %v488
  %v490 = vrot.slane %v468, %v489
  %v491 = vsel %vm402, %v490, %v486
  %v492 = vlaneseq
  %v493 = vshrl.u32 %v492, 7
  %v494 = vsub.s32 %v385, %v493
  %v495 = vrot.slane %v471, %v494
  %v496 = vlaneseq
  %v497 = vshrl.u32 %v496, 7
  %v498 = vsub.s32 %v390, %v497
  %v499 = vrot.slane %v474, %v498
  %v500 = vsel %vm395, %v499, %v495
  %v501 = vlaneseq
  %v502 = vshrl.u32 %v501, 7
  %v503 = vsub.s32 %v397, %v502
  %v504 = vrot.slane %v477, %v503
  %v505 = vsel %vm402, %v504, %v500
  %v506 = vsel %vm418, %v505, %v491
  %v508 = vsel %vm421, %v506, 0.0
  %509 = vadd.xlane.f32.xlu0 %v508
  %v510 = vpop.xlane.xlu0 %509
  %v511 = vrcp.pop %v510
  %v513 = vlaneseq
  %v514 = vshrl.u32 %v513, 7
  %v515 = vsub.s32 0, %v514
  %v516 = vrot.slane %v511, %v515
  %v517 = vlaneseq
  %v518 = vshrl.u32 %v517, 7
  %v519 = vsub.s32 1, %v518
  %v520 = vrot.slane %v511, %v519
  %v523 = vmul.f32 %v443, %v516
  %v524 = vmul.f32 %v445, %v516
  %v525 = vmul.f32 %v447, %v516
  %v526 = vmul.f32 %v449, %v520
  %v527 = vmul.f32 %v451, %v520
  %v528 = vmul.f32 %v453, %v520
  %530 = vset.pattern.permute.xlu0 0
  %531 = vperm.xlu0 %530, %v523
  %v532 = vpop.permute.xlu0 %531
  %535 = vset.pattern.permute.xlu0 0
  %536 = vperm.xlu0 %535, %v524
  %v537 = vpop.permute.xlu0 %536
  %540 = vset.pattern.permute.xlu0 0
  %541 = vperm.xlu0 %540, %v525
  %v542 = vpop.permute.xlu0 %541
  %545 = vset.pattern.permute.xlu0 0
  %546 = vperm.xlu0 %545, %v526
  %v547 = vpop.permute.xlu0 %546
  %550 = vset.pattern.permute.xlu0 0
  %551 = vperm.xlu0 %550, %v527
  %v552 = vpop.permute.xlu0 %551
  %555 = vset.pattern.permute.xlu0 0
  %556 = vperm.xlu0 %555, %v528
  %v557 = vpop.permute.xlu0 %556
  %v559 = vmul.f32 %v532, %v239
  %v560 = vmul.f32 %v537, %v240
  %v561 = vmul.f32 %v542, %v241
  %v562 = vmul.f32 %v547, %v242
  %v563 = vmul.f32 %v552, %v243
  %v564 = vmul.f32 %v557, %v244
  %v565 = vsel %vm48, %v559, 0.0
  %v566 = vsel %vm48, %v560, 0.0
  %v567 = vadd.f32 %v565, %v566
  %v568 = vsel %vm105, %v561, 0.0
  %v569 = vadd.f32 %v567, %v568
  %v570 = vrot.slane %v569, 4
  %v571 = vadd.f32 %v569, %v570
  %v572 = vrot.slane %v571, 2
  %v573 = vadd.f32 %v571, %v572
  %v574 = vrot.slane %v573, 1
  %v575 = vadd.f32 %v573, %v574
  %v576 = vsel %vm48, %v562, 0.0
  %v577 = vsel %vm48, %v563, 0.0
  %v578 = vadd.f32 %v576, %v577
  %v579 = vsel %vm105, %v564, 0.0
  %v580 = vadd.f32 %v578, %v579
  %v581 = vrot.slane %v580, 4
  %v582 = vadd.f32 %v580, %v581
  %v583 = vrot.slane %v582, 2
  %v584 = vadd.f32 %v582, %v583
  %v585 = vrot.slane %v584, 1
  %v586 = vadd.f32 %v584, %v585
  %v587 = vpack.c.bf16 %v575, %v575
  %v588 = vpack.c.bf16 %v586, %v586
  %v589 = vld [vmem:[%s4] sm:$0xf]
  %v590 = vld [vmem:[%s4 + $0x4] sm:$0xf]
  %v591 = vld [vmem:[%s4 + $0x8] sm:$0xf]
  %v592 = vld [vmem:[%s4 + $0xc] sm:$0xf]
  %v595 = vunpack.c.l.b16 %v587
  %v596 = vunpack.c.l.b16 %v588
  %v597 = vsel %vm418, %v596, %v595
  %v598 = vpack.c.b16 %v597, %v597
  %v603 = vunpack.c.l.b16 %v589
  %v604 = vunpack.c.l.b16 %v590
  %v605 = vunpack.c.l.b16 %v591
  %v606 = vunpack.c.l.b16 %v592
  %v607 = vpack.c.b16 %v604, %v603
  %v608 = vpack.c.b16 %v606, %v605
  %v612 = vsel %vm48, %v598, 0
  %614 = vmatprep.subr.bf16.mxu0 0
  %615 = vmatpush1.bf16.msra.mxu0 %v607
  %616 = vmatprep.subr.bf16.mxu0 0
  %617 = vmatpush1.bf16.msra.mxu0 %v608
  %618 = vmatprep.subr.bf16.mxu0 0
  %619 = vmatpush1.bf16.msra.mxu0 0
  %620 = vmatprep.subr.bf16.mxu0 0
  %621 = vmatpush1.bf16.msra.mxu0 0
  %622 = vmatprep.subr.bf16.mxu0 0
  %623 = vmatpush1.bf16.msra.mxu0 0
  %624 = vmatprep.subr.bf16.mxu0 0
  %625 = vmatpush1.bf16.msra.mxu0 0
  %626 = vmatprep.subr.bf16.mxu0 0
  %627 = vmatpush1.bf16.msra.mxu0 0
  %628 = vmatprep.subr.bf16.mxu0 0
  %629 = vmatpush1.bf16.msra.mxu0 0
  %630 = vmatprep.subr.bf16.mxu0 0
  %631 = vmatpush1.bf16.msra.mxu0 0
  %632 = vmatprep.subr.bf16.mxu0 0
  %633 = vmatpush1.bf16.msra.mxu0 0
  %634 = vmatprep.subr.bf16.mxu0 0
  %635 = vmatpush1.bf16.msra.mxu0 0
  %636 = vmatprep.subr.bf16.mxu0 0
  %637 = vmatpush1.bf16.msra.mxu0 0
  %638 = vmatprep.subr.bf16.mxu0 0
  %639 = vmatpush1.bf16.msra.mxu0 0
  %640 = vmatprep.subr.bf16.mxu0 0
  %641 = vmatpush1.bf16.msra.mxu0 0
  %642 = vmatprep.subr.bf16.mxu0 0
  %643 = vmatpush1.bf16.msra.mxu0 0
  %644 = vmatprep.subr.bf16.mxu0 0
  %645 = vmatpush1.bf16.msra.mxu0 0
  %646 = vmatprep.mubr.bf16.mxu0 0
  %647 = vmatmul.mubr.bf16.gmra.mrb[0].mxu0 %v612
  %v648 = vpop.f32.mrb[0].mxu0
  %v649 = vadd.f32 0.0, %v648
  %v650 = vpop.f32.mrb[0].mxu0
  %v651 = vpop.f32.mrb[0].mxu0
  %v652 = vpop.f32.mrb[0].mxu0
  %653 = vdwg.mxu0
  %v656 = vunpack.c.l.s4 1966171168
  %v657 = vunpack.c.0.s8 %v656
  %v658 = vlaneseq
  %v659 = vshrl.u32 %v658, 7
  %v660 = vsub.s32 %v657, %v659
  %v661 = vrot.slane %v649, %v660
  %v662 = vcombine.high %v661, %v661
  %v664 = vunpack.c.l.s4 1966171168
  %v665 = vunpack.c.0.s8 %v664
  %v666 = vlaneseq
  %v667 = vshrl.u32 %v666, 7
  %v668 = vsub.s32 %v665, %v667
  %v669 = vrot.slane %v661, %v668
  %v671 = vunpack.c.l.s4 1966171168
  %v672 = vunpack.c.0.s8 %v671
  %v673 = vlaneseq
  %v674 = vshrl.u32 %v673, 7
  %v675 = vsub.s32 %v672, %v674
  %v676 = vrot.slane %v662, %v675
  %v677 = vlaneseq
  %v678 = vshrl.u32 %v677, 7
  %v679 = vsub.s32 0, %v678
  %v680 = vrot.slane %v669, %v679
  %v681 = vlaneseq
  %v682 = vshrl.u32 %v681, 7
  %v683 = vsub.s32 0, %v682
  %v684 = vrot.slane %v676, %v683
  %v687 = vmul.f32 %v680, %v245
  %v688 = vmul.f32 %v680, %v246
  %v689 = vmul.f32 %v680, %v247
  %v690 = vmul.f32 %v684, %v248
  %v691 = vmul.f32 %v684, %v249
  %v692 = vmul.f32 %v684, %v250
  %v693 = vsel %vm48, %v687, 0.0
  %694 = vadd.xlane.f32.xlu0 %v693
  %v695 = vpop.xlane.xlu0 %694
  %v696 = vsel %vm48, %v688, 0.0
  %697 = vadd.xlane.f32.xlu0 %v696
  %v698 = vpop.xlane.xlu0 %697
  %v699 = vsel %vm105, %v689, 0.0
  %700 = vadd.xlane.f32.xlu0 %v699
  %v701 = vpop.xlane.xlu0 %700
  %v702 = vsel %vm48, %v690, 0.0
  %703 = vadd.xlane.f32.xlu0 %v702
  %v704 = vpop.xlane.xlu0 %703
  %v705 = vsel %vm48, %v691, 0.0
  %706 = vadd.xlane.f32.xlu0 %v705
  %v707 = vpop.xlane.xlu0 %706
  %v708 = vsel %vm105, %v692, 0.0
  %709 = vadd.xlane.f32.xlu0 %v708
  %v710 = vpop.xlane.xlu0 %709
  %v711 = vmul.f32 %v695, 0.17677669
  %v712 = vmul.f32 %v698, 0.17677669
  %v713 = vmul.f32 %v701, 0.17677669
  %v714 = vmul.f32 %v704, 0.17677669
  %v715 = vmul.f32 %v707, 0.17677669
  %v716 = vmul.f32 %v710, 0.17677669
  %v717 = vtanh.pop %v711
  %v718 = vtanh.pop %v712
  %v719 = vtanh.pop %v713
  %v720 = vtanh.pop %v714
  %v721 = vtanh.pop %v715
  %v722 = vtanh.pop %v716
  %v723 = vmul.f32 %v717, 10.0
  %v724 = vmul.f32 %v718, 10.0
  %v725 = vmul.f32 %v719, 10.0
  %v726 = vmul.f32 %v720, 10.0
  %v727 = vmul.f32 %v721, 10.0
  %v728 = vmul.f32 %v722, 10.0
  %v729 = vadd.f32 %v723, %v324
  %v730 = vadd.f32 %v724, %v328
  %v731 = vadd.f32 %v725, %v332
  %v732 = vadd.f32 %v726, %v339
  %v733 = vadd.f32 %v727, %v343
  %v734 = vadd.f32 %v728, %v347
  %741 = vset.pattern.permute.xlu0 0
  %742 = vperm.xlu0 %741, %v729
  %v743 = vpop.permute.xlu0 %742
  %744 = vset.pattern.permute.xlu0 0
  %745 = vperm.xlu0 %744, %v730
  %v746 = vpop.permute.xlu0 %745
  %747 = vset.pattern.permute.xlu0 0
  %748 = vperm.xlu0 %747, %v731
  %v749 = vpop.permute.xlu0 %748
  %750 = vset.pattern.permute.xlu0 0
  %751 = vperm.xlu0 %750, %v732
  %v752 = vpop.permute.xlu0 %751
  %753 = vset.pattern.permute.xlu0 0
  %754 = vperm.xlu0 %753, %v733
  %v755 = vpop.permute.xlu0 %754
  %756 = vset.pattern.permute.xlu0 0
  %757 = vperm.xlu0 %756, %v734
  %v758 = vpop.permute.xlu0 %757
  %v759 = vlaneseq
  %v760 = vshrl.u32 %v759, 7
  %v761 = vsub.s32 %v385, %v760
  %v762 = vrot.slane %v743, %v761
  %v763 = vlaneseq
  %v764 = vshrl.u32 %v763, 7
  %v765 = vsub.s32 %v390, %v764
  %v766 = vrot.slane %v746, %v765
  %v767 = vsel %vm395, %v766, %v762
  %v768 = vlaneseq
  %v769 = vshrl.u32 %v768, 7
  %v770 = vsub.s32 %v397, %v769
  %v771 = vrot.slane %v749, %v770
  %v772 = vsel %vm402, %v771, %v767
  %v773 = vlaneseq
  %v774 = vshrl.u32 %v773, 7
  %v775 = vsub.s32 %v385, %v774
  %v776 = vrot.slane %v752, %v775
  %v777 = vlaneseq
  %v778 = vshrl.u32 %v777, 7
  %v779 = vsub.s32 %v390, %v778
  %v780 = vrot.slane %v755, %v779
  %v781 = vsel %vm395, %v780, %v776
  %v782 = vlaneseq
  %v783 = vshrl.u32 %v782, 7
  %v784 = vsub.s32 %v397, %v783
  %v785 = vrot.slane %v758, %v784
  %v786 = vsel %vm402, %v785, %v781
  %v787 = vsel %vm418, %v786, %v772
  %v789 = vsel %vm421, %v787, -inf
  %790 = vmax.xlane.f32.xlu0 %v789
  %v791 = vpop.xlane.xlu0 %790
  %v793 = vlaneseq
  %v794 = vshrl.u32 %v793, 7
  %v795 = vsub.s32 0, %v794
  %v796 = vrot.slane %v791, %v795
  %v797 = vlaneseq
  %v798 = vshrl.u32 %v797, 7
  %v799 = vsub.s32 1, %v798
  %v800 = vrot.slane %v791, %v799
  %v803 = vsub.f32 %v729, %v796
  %v804 = vsub.f32 %v730, %v796
  %v805 = vsub.f32 %v731, %v796
  %v806 = vsub.f32 %v732, %v800
  %v807 = vsub.f32 %v733, %v800
  %v808 = vsub.f32 %v734, %v800
  %v809 = vmul.f32 %v803, 1.442695
  %v810 = vpow.pop %v809
  %v811 = vmul.f32 %v804, 1.442695
  %v812 = vpow.pop %v811
  %v813 = vmul.f32 %v805, 1.442695
  %v814 = vpow.pop %v813
  %v815 = vmul.f32 %v806, 1.442695
  %v816 = vpow.pop %v815
  %v817 = vmul.f32 %v807, 1.442695
  %v818 = vpow.pop %v817
  %v819 = vmul.f32 %v808, 1.442695
  %v820 = vpow.pop %v819
  %827 = vset.pattern.permute.xlu0 0
  %828 = vperm.xlu0 %827, %v810
  %v829 = vpop.permute.xlu0 %828
  %830 = vset.pattern.permute.xlu0 0
  %831 = vperm.xlu0 %830, %v812
  %v832 = vpop.permute.xlu0 %831
  %833 = vset.pattern.permute.xlu0 0
  %834 = vperm.xlu0 %833, %v814
  %v835 = vpop.permute.xlu0 %834
  %836 = vset.pattern.permute.xlu0 0
  %837 = vperm.xlu0 %836, %v816
  %v838 = vpop.permute.xlu0 %837
  %839 = vset.pattern.permute.xlu0 0
  %840 = vperm.xlu0 %839, %v818
  %v841 = vpop.permute.xlu0 %840
  %842 = vset.pattern.permute.xlu0 0
  %843 = vperm.xlu0 %842, %v820
  %v844 = vpop.permute.xlu0 %843
  %v845 = vlaneseq
  %v846 = vshrl.u32 %v845, 7
  %v847 = vsub.s32 %v385, %v846
  %v848 = vrot.slane %v829, %v847
  %v849 = vlaneseq
  %v850 = vshrl.u32 %v849, 7
  %v851 = vsub.s32 %v390, %v850
  %v852 = vrot.slane %v832, %v851
  %v853 = vsel %vm395, %v852, %v848
  %v854 = vlaneseq
  %v855 = vshrl.u32 %v854, 7
  %v856 = vsub.s32 %v397, %v855
  %v857 = vrot.slane %v835, %v856
  %v858 = vsel %vm402, %v857, %v853
  %v859 = vlaneseq
  %v860 = vshrl.u32 %v859, 7
  %v861 = vsub.s32 %v385, %v860
  %v862 = vrot.slane %v838, %v861
  %v863 = vlaneseq
  %v864 = vshrl.u32 %v863, 7
  %v865 = vsub.s32 %v390, %v864
  %v866 = vrot.slane %v841, %v865
  %v867 = vsel %vm395, %v866, %v862
  %v868 = vlaneseq
  %v869 = vshrl.u32 %v868, 7
  %v870 = vsub.s32 %v397, %v869
  %v871 = vrot.slane %v844, %v870
  %v872 = vsel %vm402, %v871, %v867
  %v873 = vsel %vm418, %v872, %v858
  %v875 = vsel %vm421, %v873, 0.0
  %876 = vadd.xlane.f32.xlu0 %v875
  %v877 = vpop.xlane.xlu0 %876
  %v878 = vrcp.pop %v877
  %v880 = vlaneseq
  %v881 = vshrl.u32 %v880, 7
  %v882 = vsub.s32 0, %v881
  %v883 = vrot.slane %v878, %v882
  %v884 = vlaneseq
  %v885 = vshrl.u32 %v884, 7
  %v886 = vsub.s32 1, %v885
  %v887 = vrot.slane %v878, %v886
  %v890 = vmul.f32 %v810, %v883
  %v891 = vmul.f32 %v812, %v883
  %v892 = vmul.f32 %v814, %v883
  %v893 = vmul.f32 %v816, %v887
  %v894 = vmul.f32 %v818, %v887
  %v895 = vmul.f32 %v820, %v887
  %902 = vset.pattern.permute.xlu0 0
  %903 = vperm.xlu0 %902, %v890
  %v904 = vpop.permute.xlu0 %903
  %905 = vset.pattern.permute.xlu0 0
  %906 = vperm.xlu0 %905, %v891
  %v907 = vpop.permute.xlu0 %906
  %908 = vset.pattern.permute.xlu0 0
  %909 = vperm.xlu0 %908, %v892
  %v910 = vpop.permute.xlu0 %909
  %911 = vset.pattern.permute.xlu0 0
  %912 = vperm.xlu0 %911, %v893
  %v913 = vpop.permute.xlu0 %912
  %914 = vset.pattern.permute.xlu0 0
  %915 = vperm.xlu0 %914, %v894
  %v916 = vpop.permute.xlu0 %915
  %917 = vset.pattern.permute.xlu0 0
  %918 = vperm.xlu0 %917, %v895
  %v919 = vpop.permute.xlu0 %918
  %v920 = vlaneseq
  %v921 = vshrl.u32 %v920, 7
  %v922 = vsub.s32 %v385, %v921
  %v923 = vrot.slane %v904, %v922
  %v924 = vlaneseq
  %v925 = vshrl.u32 %v924, 7
  %v926 = vsub.s32 %v390, %v925
  %v927 = vrot.slane %v907, %v926
  %v928 = vsel %vm395, %v927, %v923
  %v929 = vlaneseq
  %v930 = vshrl.u32 %v929, 7
  %v931 = vsub.s32 %v397, %v930
  %v932 = vrot.slane %v910, %v931
  %v933 = vsel %vm402, %v932, %v928
  %v934 = vlaneseq
  %v935 = vshrl.u32 %v934, 7
  %v936 = vsub.s32 %v385, %v935
  %v937 = vrot.slane %v913, %v936
  %v938 = vlaneseq
  %v939 = vshrl.u32 %v938, 7
  %v940 = vsub.s32 %v390, %v939
  %v941 = vrot.slane %v916, %v940
  %v942 = vsel %vm395, %v941, %v937
  %v943 = vlaneseq
  %v944 = vshrl.u32 %v943, 7
  %v945 = vsub.s32 %v397, %v944
  %v946 = vrot.slane %v919, %v945
  %v947 = vsel %vm402, %v946, %v942
  %v948 = vsel %vm418, %v947, %v933
  %950 = vst.msk [vmem:[%s5] sm:$0x3] %vm421, %v948
  // Predicated region
  $region22: #{het_flat_decoder_forward.1} parent=0 // pred_check
    _
  $region23: #{het_flat_decoder_forward.1} parent=0 // pred_check_branch
    %952 = sbr.rel (0) target = $region25
  $region24: #{het_flat_decoder_forward.1} parent=0 // pred_region
    _
  $region25: #{het_flat_decoder_forward.1} parent=0 // pred_fallthru
    _
  // Predicated region
  $region26: #{het_flat_decoder_forward.1} parent=0 // pred_check
    _
  $region27: #{het_flat_decoder_forward.1} parent=0 // pred_check_branch
    %954 = sbr.rel (0) target = $region29
  $region28: #{het_flat_decoder_forward.1} parent=0 // pred_region
    _
  $region29: #{het_flat_decoder_forward.1} parent=0 // pred_fallthru
    _

</llo_original>
